<compile_context>
chip_gen: v7x
topology: tpu7x:2x2x1
jax: 0.10.0
libtpu: 0.0.40
codegen_flags: <defaults>
</compile_context>

<pallas_src>
import functools

import jax
import jax.numpy as jnp
from jax import lax
from jax.experimental import pallas as pl
from jax.experimental.pallas import tpu as pltpu


def _round_up(x, m):
    return (x + m - 1) // m * m


def _bn_act_conv(x, scale, shift, w_mat, masks, *, k, W, apply_relu, mxu_dtype):
    """BN(eval) [-> ReLU] -> Conv2d(padding=k//2, bias=False), channels-first.

    x:      (Cin_pad, L)        f32, L = B_tile*H*W, lane = b*H*W + h*W + w
    scale:  (Cin_pad, 1)        gamma / sqrt(var + eps)   (0 on padded channels)
    shift:  (Cin_pad, 1)        beta - mean * scale       (0 on padded channels)
    w_mat:  (Cout, k*k*Cin_pad) conv weight (mxu_dtype), rows ordered (dy,dx,cin)
    masks:  (k*k, L)            {0,1} f32 source-pixel validity per tap
    returns (Cout, L) f32
    """
    p = k // 2
    act = x * scale + shift                          # BN (f32, VPU)
    if apply_relu:
        act = jnp.maximum(act, 0.0)

    # im2col: one static lane rotation + one precomputed-mask multiply per tap.
    cols = []
    for dy in range(k):
        for dx in range(k):
            dyr, dxr = dy - p, dx - p
            off = dyr * W + dxr                      # flattened lane shift
            t = dy * k + dx
            shifted = act if off == 0 else jnp.roll(act, -off, axis=-1)
            if dyr != 0 or dxr != 0:
                shifted = shifted * masks[t:t + 1, :]
            cols.append(shifted)
    im2col = jnp.concatenate(cols, axis=0)           # (k*k*Cin_pad, L)

    # Single MXU matmul per stage; result lane dim stays L (lane-dense stores).
    return jnp.dot(w_mat, im2col.astype(mxu_dtype),
                   preferred_element_type=jnp.float32)


def _convblock_kernel(x_ref, m_ref, p_ref, w0_ref, w1_ref, o_ref, *,
                      k, W, cin_pad, cmid_pad, relu0, mxu_dtype):
    x = x_ref[...].astype(jnp.float32)               # (Cin_pad, L)
    masks = m_ref[...]                               # (k*k, L) f32
    pparams = p_ref[...]                             # (Cmax, 4) f32
    s0 = pparams[0:cin_pad, 0:1]
    b0 = pparams[0:cin_pad, 1:2]
    s1 = pparams[0:cmid_pad, 2:3]
    b1 = pparams[0:cmid_pad, 3:4]

    y = _bn_act_conv(x, s0, b0, w0_ref[...], masks, k=k, W=W,
                     apply_relu=relu0, mxu_dtype=mxu_dtype)
    # Intermediate `y` stays on-chip (vregs/VMEM); never written back to HBM.
    z = _bn_act_conv(y, s1, b1, w1_ref[...], masks, k=k, W=W,
                     apply_relu=True, mxu_dtype=mxu_dtype)
    o_ref[...] = z.astype(o_ref.dtype)


def _fuse_bn(p, eps=1e-5):
    scale = p["gamma"] / jnp.sqrt(p["var"] + eps)
    shift = p["beta"] - p["mean"] * scale
    return scale.astype(jnp.float32), shift.astype(jnp.float32)


def _tap_masks(H, W, k):
    """(k*k, H*W) {0,1} f32: is the source pixel of tap (dy,dx) inside the image."""
    p = k // 2
    hh = jnp.arange(H * W, dtype=jnp.int32) // W
    ww = jnp.arange(H * W, dtype=jnp.int32) % W
    rows = []
    for dy in range(k):
        for dx in range(k):
            dyr, dxr = dy - p, dx - p
            valid = ((hh + dyr >= 0) & (hh + dyr < H) &
                     (ww + dxr >= 0) & (ww + dxr < W))
            rows.append(valid)
    return jnp.stack(rows).astype(jnp.float32)


def convblock_forward(x_nchw, params, *, block=-1, mxu_dtype=jnp.bfloat16,
                      vmem_budget_bytes=24 << 20):
    """Pallas implementation of convblock.forward. x_nchw: (N, Cin, H, W)."""
    N, Cin, H, W = x_nchw.shape
    HW = H * W
    w0 = params["conv_0"]["weight"]                  # (Cout0, Cin, k, k)  OIHW
    w1 = params["conv_1"]["weight"]                  # (Cout1, Cout0, k, k)
    Cout0, _, k, _ = w0.shape
    Cout1 = w1.shape[0]
    # TODO(synk): even kernel sizes change the output spatial shape under
    # PyTorch's padding=k//2; only odd k is supported here.
    assert k % 2 == 1, "only odd kernel sizes supported"

    cin_pad = _round_up(Cin, 8)
    cmid_pad = _round_up(Cout0, 8)
    cpm = max(cin_pad, cmid_pad)

    # --- how many images fold into one grid step (VMEM-budgeted) -----------
    per_img = 4 * HW * (2 * cin_pad + k * k * cin_pad + cmid_pad
                        + k * k * cmid_pad + 2 * Cout1)
    b_tile = max(1, min(N, vmem_budget_bytes // max(per_img, 1)))
    while N % b_tile:
        b_tile -= 1
    n_tiles = N // b_tile
    L = b_tile * HW                                   # lane dim per grid step

    # --- activations: channels-first, batch folded into lanes --------------
    # (N,C,H,W) -> (C, N*H*W); no astype (kernel upcasts after load).
    x_cf = jnp.transpose(x_nchw, (1, 0, 2, 3)).reshape(Cin, N * HW)
    if cin_pad > Cin:
        x_cf = jnp.pad(x_cf, ((0, cin_pad - Cin), (0, 0)))

    # --- weights: OIHW -> (O, k*k*I), channel-padded, rows in (dy,dx,cin) --
    w0p = jnp.pad(w0, ((0, cmid_pad - Cout0), (0, cin_pad - Cin), (0, 0), (0, 0)))
    w1p = jnp.pad(w1, ((0, 0), (0, cmid_pad - Cout0), (0, 0), (0, 0)))
    w0_mat = jnp.transpose(w0p, (0, 2, 3, 1)).reshape(
        cmid_pad, k * k * cin_pad).astype(mxu_dtype)
    w1_mat = jnp.transpose(w1p, (0, 2, 3, 1)).reshape(
        Cout1, k * k * cmid_pad).astype(mxu_dtype)

    # --- BN params packed into ONE (Cmax, 4) operand ------------------------
    s0, b0 = _fuse_bn(params["conv_0"])
    s1, b1 = _fuse_bn(params["conv_1"])
    packed = jnp.zeros((cpm, 4), jnp.float32)
    packed = packed.at[:Cin, 0].set(s0).at[:Cin, 1].set(b0)
    packed = packed.at[:Cout0, 2].set(s1).at[:Cout0, 3].set(b1)

    # --- boundary masks: built once, shared by both stages -----------------
    masks = jnp.tile(_tap_masks(H, W, k), (1, b_tile))    # (k*k, L)

    kernel = functools.partial(
        _convblock_kernel, k=k, W=W, cin_pad=cin_pad, cmid_pad=cmid_pad,
        relu0=(block != 0), mxu_dtype=mxu_dtype)

    out2d = pl.pallas_call(
        kernel,
        out_shape=jax.ShapeDtypeStruct((Cout1, N * HW), jnp.float32),
        grid_spec=pltpu.PrefetchScalarGridSpec(
            num_scalar_prefetch=0,
            grid=(n_tiles,),
            in_specs=[
                pl.BlockSpec((cin_pad, L), lambda b: (0, b)),
                pl.BlockSpec((k * k, L), lambda b: (0, 0)),
                pl.BlockSpec((cpm, 4), lambda b: (0, 0)),
                pl.BlockSpec((cmid_pad, k * k * cin_pad), lambda b: (0, 0)),
                pl.BlockSpec((Cout1, k * k * cmid_pad), lambda b: (0, 0)),
            ],
            out_specs=pl.BlockSpec((Cout1, L), lambda b: (0, b)),
        ),
        # TODO(synk): on v7x, use pltpu.CORE_PARALLEL (or pl.core_map) with
        # n_tiles == num TensorCores for true 2-TC sharding; plain "parallel"
        # is kept here for portability across v5e/v6e/v7x.
        compiler_params=pltpu.CompilerParams(
            dimension_semantics=("parallel",)),
    )(x_cf, masks, packed, w0_mat, w1_mat)

    return out2d.reshape(Cout1, N, H, W).transpose(1, 0, 2, 3)


# ---------------------- pure-JAX reference (for checking) -------------------

def _ref_stage(x_nchw, p, apply_relu, eps=1e-5):
    inv = p["gamma"] / jnp.sqrt(p["var"] + eps)
    y = ((x_nchw - p["mean"][None, :, None, None]) * inv[None, :, None, None]
         + p["beta"][None, :, None, None])
    if apply_relu:
        y = jnp.maximum(y, 0.0)
    return lax.conv_general_dilated(
        y, p["weight"], window_strides=(1, 1), padding="SAME",
        dimension_numbers=("NCHW", "OIHW", "NCHW"))


def convblock_reference(x_nchw, params, *, block=-1):
    y = _ref_stage(x_nchw.astype(jnp.float32), params["conv_0"],
                   apply_relu=(block != 0))
    return _ref_stage(y, params["conv_1"], apply_relu=True)


# ---------------------------------- main -------------------------------------

def _make_stage_params(key, ch_in, ch_out, k):
    k0, k1, k2, k3, k4 = jax.random.split(key, 5)
    return {
        "gamma": jax.random.uniform(k0, (ch_in,), jnp.float32, 0.5, 1.5),
        "beta": 0.1 * jax.random.normal(k1, (ch_in,), jnp.float32),
        "mean": 0.1 * jax.random.normal(k2, (ch_in,), jnp.float32),
        "var": jax.random.uniform(k3, (ch_in,), jnp.float32, 0.5, 1.5),
        "weight": (0.1 * jax.random.normal(k4, (ch_out, ch_in, k, k),
                                           jnp.float32)),  # OIHW, bias=False
    }


if __name__ == "__main__":
    N, CH_IN, CH_OUT, H, W, KSZ = 2, 4, 8, 16, 16, 3
    BLOCK = -1  # default constructor argument of convblock

    key = jax.random.PRNGKey(0)
    kx, kp0, kp1 = jax.random.split(key, 3)

    x = jax.random.normal(kx, (N, CH_IN, H, W), jnp.float32)   # NCHW input
    params = {
        "conv_0": _make_stage_params(kp0, CH_IN, CH_OUT, KSZ),
        "conv_1": _make_stage_params(kp1, CH_OUT, CH_OUT, KSZ),
    }

    out = jax.block_until_ready(convblock_forward(x, params, block=BLOCK))
    ref = jax.block_until_ready(convblock_reference(x, params, block=BLOCK))

    assert out.shape == (N, CH_OUT, H, W), out.shape
    max_err = float(jnp.max(jnp.abs(out - ref)))
    # bf16 MXU operands (default) -> looser tolerance vs. the pure-f32 reference.
    assert jnp.allclose(out, ref, rtol=2e-2, atol=2e-2), max_err

    print("KERNEL_OK")
</pallas_src>

<mosaic_0001>
module attributes {stable_mosaic.version = 11 : i64} {
  func.func @_convblock_kernel(%arg0: i32, %arg1: memref<8x512xf32, #tpu.memory_space<vmem>>, %arg2: memref<9x512xf32, #tpu.memory_space<vmem>>, %arg3: memref<8x4xf32, #tpu.memory_space<vmem>>, %arg4: memref<8x72xbf16, #tpu.memory_space<vmem>>, %arg5: memref<8x72xbf16, #tpu.memory_space<vmem>>, %arg6: memref<8x512xf32, #tpu.memory_space<vmem>>) attributes {dimension_semantics = [#tpu.dimension_semantics<parallel>], iteration_bounds = array<i64: 1>, scalar_prefetch = 0 : i64, scratch_operands = 0 : i64, tpu.core_type = #tpu.core_type<tc>, window_params = [{transform_indices = @transform_0, window_bounds = array<i64: 8, 512>}, {pipeline_mode = #tpu.pipeline_mode<synchronous>, transform_indices = @transform_1, window_bounds = array<i64: 9, 512>}, {pipeline_mode = #tpu.pipeline_mode<synchronous>, transform_indices = @transform_2, window_bounds = array<i64: 8, 4>}, {pipeline_mode = #tpu.pipeline_mode<synchronous>, transform_indices = @transform_3, window_bounds = array<i64: 8, 72>}, {pipeline_mode = #tpu.pipeline_mode<synchronous>, transform_indices = @transform_4, window_bounds = array<i64: 8, 72>}, {transform_indices = @transform_5, window_bounds = array<i64: 8, 512>}]} {
    %c0 = arith.constant 0 : index
    %c0_0 = arith.constant 0 : index
    %0 = vector.load %arg1[%c0, %c0_0] : memref<8x512xf32, #tpu.memory_space<vmem>>, vector<8x512xf32>
    %c0_1 = arith.constant 0 : index
    %c0_2 = arith.constant 0 : index
    %1 = vector.load %arg2[%c0_1, %c0_2] : memref<9x512xf32, #tpu.memory_space<vmem>>, vector<9x512xf32>
    %c0_3 = arith.constant 0 : index
    %c0_4 = arith.constant 0 : index
    %2 = vector.load %arg3[%c0_3, %c0_4] : memref<8x4xf32, #tpu.memory_space<vmem>>, vector<8x4xf32>
    %3 = vector.extract_strided_slice %2 {offsets = [0, 0], sizes = [8, 1], strides = [1, 1]} : vector<8x4xf32> to vector<8x1xf32>
    %4 = vector.extract_strided_slice %2 {offsets = [0, 1], sizes = [8, 1], strides = [1, 1]} : vector<8x4xf32> to vector<8x1xf32>
    %5 = vector.extract_strided_slice %2 {offsets = [0, 2], sizes = [8, 1], strides = [1, 1]} : vector<8x4xf32> to vector<8x1xf32>
    %6 = vector.extract_strided_slice %2 {offsets = [0, 3], sizes = [8, 1], strides = [1, 1]} : vector<8x4xf32> to vector<8x1xf32>
    %c0_5 = arith.constant 0 : index
    %c0_6 = arith.constant 0 : index
    %7 = vector.load %arg4[%c0_5, %c0_6] : memref<8x72xbf16, #tpu.memory_space<vmem>>, vector<8x72xbf16>
    %8 = vector.broadcast %3 : vector<8x1xf32> to vector<8x512xf32>
    %9 = arith.mulf %0, %8 : vector<8x512xf32>
    %10 = vector.broadcast %4 : vector<8x1xf32> to vector<8x512xf32>
    %11 = arith.addf %9, %10 : vector<8x512xf32>
    %cst = arith.constant 0.000000e+00 : f32
    %12 = vector.broadcast %cst : f32 to vector<8x512xf32>
    %13 = arith.maximumf %11, %12 : vector<8x512xf32>
    %14 = vector.extract_strided_slice %13 {offsets = [0, 495], sizes = [8, 17], strides = [1, 1]} : vector<8x512xf32> to vector<8x17xf32>
    %15 = vector.extract_strided_slice %13 {offsets = [0, 0], sizes = [8, 495], strides = [1, 1]} : vector<8x512xf32> to vector<8x495xf32>
    %16 = tpu.concatenate %14, %15 in 1 : vector<8x17xf32>, vector<8x495xf32> -> vector<8x512xf32>
    %17 = vector.extract_strided_slice %1 {offsets = [0, 0], sizes = [1, 512], strides = [1, 1]} : vector<9x512xf32> to vector<1x512xf32>
    %18 = vector.broadcast %17 : vector<1x512xf32> to vector<8x512xf32>
    %19 = arith.mulf %16, %18 : vector<8x512xf32>
    %20 = vector.extract_strided_slice %13 {offsets = [0, 496], sizes = [8, 16], strides = [1, 1]} : vector<8x512xf32> to vector<8x16xf32>
    %21 = vector.extract_strided_slice %13 {offsets = [0, 0], sizes = [8, 496], strides = [1, 1]} : vector<8x512xf32> to vector<8x496xf32>
    %22 = tpu.concatenate %20, %21 in 1 : vector<8x16xf32>, vector<8x496xf32> -> vector<8x512xf32>
    %23 = vector.extract_strided_slice %1 {offsets = [1, 0], sizes = [1, 512], strides = [1, 1]} : vector<9x512xf32> to vector<1x512xf32>
    %24 = vector.broadcast %23 : vector<1x512xf32> to vector<8x512xf32>
    %25 = arith.mulf %22, %24 : vector<8x512xf32>
    %26 = vector.extract_strided_slice %13 {offsets = [0, 497], sizes = [8, 15], strides = [1, 1]} : vector<8x512xf32> to vector<8x15xf32>
    %27 = vector.extract_strided_slice %13 {offsets = [0, 0], sizes = [8, 497], strides = [1, 1]} : vector<8x512xf32> to vector<8x497xf32>
    %28 = tpu.concatenate %26, %27 in 1 : vector<8x15xf32>, vector<8x497xf32> -> vector<8x512xf32>
    %29 = vector.extract_strided_slice %1 {offsets = [2, 0], sizes = [1, 512], strides = [1, 1]} : vector<9x512xf32> to vector<1x512xf32>
    %30 = vector.broadcast %29 : vector<1x512xf32> to vector<8x512xf32>
    %31 = arith.mulf %28, %30 : vector<8x512xf32>
    %32 = vector.extract_strided_slice %13 {offsets = [0, 511], sizes = [8, 1], strides = [1, 1]} : vector<8x512xf32> to vector<8x1xf32>
    %33 = vector.extract_strided_slice %13 {offsets = [0, 0], sizes = [8, 511], strides = [1, 1]} : vector<8x512xf32> to vector<8x511xf32>
    %34 = tpu.concatenate %32, %33 in 1 : vector<8x1xf32>, vector<8x511xf32> -> vector<8x512xf32>
    %35 = vector.extract_strided_slice %1 {offsets = [3, 0], sizes = [1, 512], strides = [1, 1]} : vector<9x512xf32> to vector<1x512xf32>
    %36 = vector.broadcast %35 : vector<1x512xf32> to vector<8x512xf32>
    %37 = arith.mulf %34, %36 : vector<8x512xf32>
    %38 = vector.extract_strided_slice %13 {offsets = [0, 1], sizes = [8, 511], strides = [1, 1]} : vector<8x512xf32> to vector<8x511xf32>
    %39 = vector.extract_strided_slice %13 {offsets = [0, 0], sizes = [8, 1], strides = [1, 1]} : vector<8x512xf32> to vector<8x1xf32>
    %40 = tpu.concatenate %38, %39 in 1 : vector<8x511xf32>, vector<8x1xf32> -> vector<8x512xf32>
    %41 = vector.extract_strided_slice %1 {offsets = [5, 0], sizes = [1, 512], strides = [1, 1]} : vector<9x512xf32> to vector<1x512xf32>
    %42 = vector.broadcast %41 : vector<1x512xf32> to vector<8x512xf32>
    %43 = arith.mulf %40, %42 : vector<8x512xf32>
    %44 = vector.extract_strided_slice %13 {offsets = [0, 15], sizes = [8, 497], strides = [1, 1]} : vector<8x512xf32> to vector<8x497xf32>
    %45 = vector.extract_strided_slice %13 {offsets = [0, 0], sizes = [8, 15], strides = [1, 1]} : vector<8x512xf32> to vector<8x15xf32>
    %46 = tpu.concatenate %44, %45 in 1 : vector<8x497xf32>, vector<8x15xf32> -> vector<8x512xf32>
    %47 = vector.extract_strided_slice %1 {offsets = [6, 0], sizes = [1, 512], strides = [1, 1]} : vector<9x512xf32> to vector<1x512xf32>
    %48 = vector.broadcast %47 : vector<1x512xf32> to vector<8x512xf32>
    %49 = arith.mulf %46, %48 : vector<8x512xf32>
    %50 = vector.extract_strided_slice %13 {offsets = [0, 16], sizes = [8, 496], strides = [1, 1]} : vector<8x512xf32> to vector<8x496xf32>
    %51 = vector.extract_strided_slice %13 {offsets = [0, 0], sizes = [8, 16], strides = [1, 1]} : vector<8x512xf32> to vector<8x16xf32>
    %52 = tpu.concatenate %50, %51 in 1 : vector<8x496xf32>, vector<8x16xf32> -> vector<8x512xf32>
    %53 = vector.extract_strided_slice %1 {offsets = [7, 0], sizes = [1, 512], strides = [1, 1]} : vector<9x512xf32> to vector<1x512xf32>
    %54 = vector.broadcast %53 : vector<1x512xf32> to vector<8x512xf32>
    %55 = arith.mulf %52, %54 : vector<8x512xf32>
    %56 = vector.extract_strided_slice %13 {offsets = [0, 17], sizes = [8, 495], strides = [1, 1]} : vector<8x512xf32> to vector<8x495xf32>
    %57 = vector.extract_strided_slice %13 {offsets = [0, 0], sizes = [8, 17], strides = [1, 1]} : vector<8x512xf32> to vector<8x17xf32>
    %58 = tpu.concatenate %56, %57 in 1 : vector<8x495xf32>, vector<8x17xf32> -> vector<8x512xf32>
    %59 = vector.extract_strided_slice %1 {offsets = [8, 0], sizes = [1, 512], strides = [1, 1]} : vector<9x512xf32> to vector<1x512xf32>
    %60 = vector.broadcast %59 : vector<1x512xf32> to vector<8x512xf32>
    %61 = arith.mulf %58, %60 : vector<8x512xf32>
    %62 = tpu.concatenate %19, %25, %31, %37, %13, %43, %49, %55, %61 in 0 : vector<8x512xf32>, vector<8x512xf32>, vector<8x512xf32>, vector<8x512xf32>, vector<8x512xf32>, vector<8x512xf32>, vector<8x512xf32>, vector<8x512xf32>, vector<8x512xf32> -> vector<72x512xf32>
    %63 = arith.truncf %62 : vector<72x512xf32> to vector<72x512xbf16>
    %cst_7 = arith.constant dense<0.000000e+00> : vector<8x512xf32>
    %64 = tpu.matmul %7, %63, %cst_7 {dimension_numbers = #tpu.dot_dimension_numbers<[1], [0], [0], [1], [0, 0, 1, 1], [], []>} : vector<8x72xbf16>, vector<72x512xbf16>, vector<8x512xf32> -> vector<8x512xf32>
    %c0_8 = arith.constant 0 : index
    %c0_9 = arith.constant 0 : index
    %65 = vector.load %arg5[%c0_8, %c0_9] : memref<8x72xbf16, #tpu.memory_space<vmem>>, vector<8x72xbf16>
    %66 = vector.broadcast %5 : vector<8x1xf32> to vector<8x512xf32>
    %67 = arith.mulf %64, %66 : vector<8x512xf32>
    %68 = vector.broadcast %6 : vector<8x1xf32> to vector<8x512xf32>
    %69 = arith.addf %67, %68 : vector<8x512xf32>
    %cst_10 = arith.constant 0.000000e+00 : f32
    %70 = vector.broadcast %cst_10 : f32 to vector<8x512xf32>
    %71 = arith.maximumf %69, %70 : vector<8x512xf32>
    %72 = vector.extract_strided_slice %71 {offsets = [0, 495], sizes = [8, 17], strides = [1, 1]} : vector<8x512xf32> to vector<8x17xf32>
    %73 = vector.extract_strided_slice %71 {offsets = [0, 0], sizes = [8, 495], strides = [1, 1]} : vector<8x512xf32> to vector<8x495xf32>
    %74 = tpu.concatenate %72, %73 in 1 : vector<8x17xf32>, vector<8x495xf32> -> vector<8x512xf32>
    %75 = vector.extract_strided_slice %1 {offsets = [0, 0], sizes = [1, 512], strides = [1, 1]} : vector<9x512xf32> to vector<1x512xf32>
    %76 = vector.broadcast %75 : vector<1x512xf32> to vector<8x512xf32>
    %77 = arith.mulf %74, %76 : vector<8x512xf32>
    %78 = vector.extract_strided_slice %71 {offsets = [0, 496], sizes = [8, 16], strides = [1, 1]} : vector<8x512xf32> to vector<8x16xf32>
    %79 = vector.extract_strided_slice %71 {offsets = [0, 0], sizes = [8, 496], strides = [1, 1]} : vector<8x512xf32> to vector<8x496xf32>
    %80 = tpu.concatenate %78, %79 in 1 : vector<8x16xf32>, vector<8x496xf32> -> vector<8x512xf32>
    %81 = vector.extract_strided_slice %1 {offsets = [1, 0], sizes = [1, 512], strides = [1, 1]} : vector<9x512xf32> to vector<1x512xf32>
    %82 = vector.broadcast %81 : vector<1x512xf32> to vector<8x512xf32>
    %83 = arith.mulf %80, %82 : vector<8x512xf32>
    %84 = vector.extract_strided_slice %71 {offsets = [0, 497], sizes = [8, 15], strides = [1, 1]} : vector<8x512xf32> to vector<8x15xf32>
    %85 = vector.extract_strided_slice %71 {offsets = [0, 0], sizes = [8, 497], strides = [1, 1]} : vector<8x512xf32> to vector<8x497xf32>
    %86 = tpu.concatenate %84, %85 in 1 : vector<8x15xf32>, vector<8x497xf32> -> vector<8x512xf32>
    %87 = vector.extract_strided_slice %1 {offsets = [2, 0], sizes = [1, 512], strides = [1, 1]} : vector<9x512xf32> to vector<1x512xf32>
    %88 = vector.broadcast %87 : vector<1x512xf32> to vector<8x512xf32>
    %89 = arith.mulf %86, %88 : vector<8x512xf32>
    %90 = vector.extract_strided_slice %71 {offsets = [0, 511], sizes = [8, 1], strides = [1, 1]} : vector<8x512xf32> to vector<8x1xf32>
    %91 = vector.extract_strided_slice %71 {offsets = [0, 0], sizes = [8, 511], strides = [1, 1]} : vector<8x512xf32> to vector<8x511xf32>
    %92 = tpu.concatenate %90, %91 in 1 : vector<8x1xf32>, vector<8x511xf32> -> vector<8x512xf32>
    %93 = vector.extract_strided_slice %1 {offsets = [3, 0], sizes = [1, 512], strides = [1, 1]} : vector<9x512xf32> to vector<1x512xf32>
    %94 = vector.broadcast %93 : vector<1x512xf32> to vector<8x512xf32>
    %95 = arith.mulf %92, %94 : vector<8x512xf32>
    %96 = vector.extract_strided_slice %71 {offsets = [0, 1], sizes = [8, 511], strides = [1, 1]} : vector<8x512xf32> to vector<8x511xf32>
    %97 = vector.extract_strided_slice %71 {offsets = [0, 0], sizes = [8, 1], strides = [1, 1]} : vector<8x512xf32> to vector<8x1xf32>
    %98 = tpu.concatenate %96, %97 in 1 : vector<8x511xf32>, vector<8x1xf32> -> vector<8x512xf32>
    %99 = vector.extract_strided_slice %1 {offsets = [5, 0], sizes = [1, 512], strides = [1, 1]} : vector<9x512xf32> to vector<1x512xf32>
    %100 = vector.broadcast %99 : vector<1x512xf32> to vector<8x512xf32>
    %101 = arith.mulf %98, %100 : vector<8x512xf32>
    %102 = vector.extract_strided_slice %71 {offsets = [0, 15], sizes = [8, 497], strides = [1, 1]} : vector<8x512xf32> to vector<8x497xf32>
    %103 = vector.extract_strided_slice %71 {offsets = [0, 0], sizes = [8, 15], strides = [1, 1]} : vector<8x512xf32> to vector<8x15xf32>
    %104 = tpu.concatenate %102, %103 in 1 : vector<8x497xf32>, vector<8x15xf32> -> vector<8x512xf32>
    %105 = vector.extract_strided_slice %1 {offsets = [6, 0], sizes = [1, 512], strides = [1, 1]} : vector<9x512xf32> to vector<1x512xf32>
    %106 = vector.broadcast %105 : vector<1x512xf32> to vector<8x512xf32>
    %107 = arith.mulf %104, %106 : vector<8x512xf32>
    %108 = vector.extract_strided_slice %71 {offsets = [0, 16], sizes = [8, 496], strides = [1, 1]} : vector<8x512xf32> to vector<8x496xf32>
    %109 = vector.extract_strided_slice %71 {offsets = [0, 0], sizes = [8, 16], strides = [1, 1]} : vector<8x512xf32> to vector<8x16xf32>
    %110 = tpu.concatenate %108, %109 in 1 : vector<8x496xf32>, vector<8x16xf32> -> vector<8x512xf32>
    %111 = vector.extract_strided_slice %1 {offsets = [7, 0], sizes = [1, 512], strides = [1, 1]} : vector<9x512xf32> to vector<1x512xf32>
    %112 = vector.broadcast %111 : vector<1x512xf32> to vector<8x512xf32>
    %113 = arith.mulf %110, %112 : vector<8x512xf32>
    %114 = vector.extract_strided_slice %71 {offsets = [0, 17], sizes = [8, 495], strides = [1, 1]} : vector<8x512xf32> to vector<8x495xf32>
    %115 = vector.extract_strided_slice %71 {offsets = [0, 0], sizes = [8, 17], strides = [1, 1]} : vector<8x512xf32> to vector<8x17xf32>
    %116 = tpu.concatenate %114, %115 in 1 : vector<8x495xf32>, vector<8x17xf32> -> vector<8x512xf32>
    %117 = vector.extract_strided_slice %1 {offsets = [8, 0], sizes = [1, 512], strides = [1, 1]} : vector<9x512xf32> to vector<1x512xf32>
    %118 = vector.broadcast %117 : vector<1x512xf32> to vector<8x512xf32>
    %119 = arith.mulf %116, %118 : vector<8x512xf32>
    %120 = tpu.concatenate %77, %83, %89, %95, %71, %101, %107, %113, %119 in 0 : vector<8x512xf32>, vector<8x512xf32>, vector<8x512xf32>, vector<8x512xf32>, vector<8x512xf32>, vector<8x512xf32>, vector<8x512xf32>, vector<8x512xf32>, vector<8x512xf32> -> vector<72x512xf32>
    %121 = arith.truncf %120 : vector<72x512xf32> to vector<72x512xbf16>
    %cst_11 = arith.constant dense<0.000000e+00> : vector<8x512xf32>
    %122 = tpu.matmul %65, %121, %cst_11 {dimension_numbers = #tpu.dot_dimension_numbers<[1], [0], [0], [1], [0, 0, 1, 1], [], []>} : vector<8x72xbf16>, vector<72x512xbf16>, vector<8x512xf32> -> vector<8x512xf32>
    %c0_12 = arith.constant 0 : index
    %c0_13 = arith.constant 0 : index
    %123 = vector.load %arg6[%c0_12, %c0_13] : memref<8x512xf32, #tpu.memory_space<vmem>>, vector<8x512xf32>
    tpu.vector_store %arg6[%c0_12, %c0_13], %122 {strides = array<i32>} : memref<8x512xf32, #tpu.memory_space<vmem>>, vector<8x512xf32>,
    return
  }
  func.func @transform_0(%arg0: i32) -> (i32, i32) {
    %c0_i32 = arith.constant 0 : i32
    %c0_i32_0 = arith.constant 0 : i32
    return %c0_i32, %arg0 : i32, i32
  }
  func.func @transform_1(%arg0: i32) -> (i32, i32) {
    %c0_i32 = arith.constant 0 : i32
    %c0_i32_0 = arith.constant 0 : i32
    %c0_i32_1 = arith.constant 0 : i32
    return %c0_i32, %c0_i32_0 : i32, i32
  }
  func.func @transform_2(%arg0: i32) -> (i32, i32) {
    %c0_i32 = arith.constant 0 : i32
    %c0_i32_0 = arith.constant 0 : i32
    %c0_i32_1 = arith.constant 0 : i32
    return %c0_i32, %c0_i32_0 : i32, i32
  }
  func.func @transform_3(%arg0: i32) -> (i32, i32) {
    %c0_i32 = arith.constant 0 : i32
    %c0_i32_0 = arith.constant 0 : i32
    %c0_i32_1 = arith.constant 0 : i32
    return %c0_i32, %c0_i32_0 : i32, i32
  }
  func.func @transform_4(%arg0: i32) -> (i32, i32) {
    %c0_i32 = arith.constant 0 : i32
    %c0_i32_0 = arith.constant 0 : i32
    %c0_i32_1 = arith.constant 0 : i32
    return %c0_i32, %c0_i32_0 : i32, i32
  }
  func.func @transform_5(%arg0: i32) -> (i32, i32) {
    %c0_i32 = arith.constant 0 : i32
    %c0_i32_0 = arith.constant 0 : i32
    return %c0_i32, %arg0 : i32, i32
  }
}

</mosaic_0001>

<llo_original>
// kernel: tpu_custom_call.1
$region0: #{tpu_custom_call.1}
  #allocation0 [shape = 'u32[]', space=smem, size = 0x4, offset = 0x4, fixed_abs, tag = 'smem constant byte address 0x4 - core index']
  #allocation1 [shape = 'u32[144,128]{1,0:T(1,128)}', space=vmem, size = 0x12000, scoped, tag = 'internal scratch']
  %s0 = inlined_call_operand.hbm [shape: f32[8,512], index: 0, kind: input, shape index: {}]
  %s1 = inlined_call_operand.hbm [shape: f32[9,512], index: 1, kind: input, shape index: {}]
  %s2 = inlined_call_operand.vmem [shape: f32[8,4], index: 2, kind: input, shape index: {}]
  %s3 = inlined_call_operand.vmem [shape: bf16[8,72], index: 3, kind: input, shape index: {}]
  %s4 = inlined_call_operand.vmem [shape: bf16[8,72], index: 4, kind: input, shape index: {}]
  %s5 = inlined_call_operand.hbm [shape: f32[8,512], index: 5, kind: output, shape index: {}]
  %s6 = sld [smem:[#allocation0]]
  $region38: #{tpu_custom_call.1} parent=0
    _
  %s8 = ssub.s32 1, %s6
  %s9 = scalar_select 0, %s8, %s6
  $region1: #{tpu_custom_call.1} parent=0
    #allocation2 [shape = 'u8[16384]{0}', space=vmem, size = 0x4000, scoped, tag = 'input window, operand 0, single buffered']
    #allocation3 [shape = 's32[1]{0}', space=sflag, size = 0x4, scoped, tag = 'scoped memory for tpu_custom_call.1']
    #allocation4 [shape = 's32[1]{0}', space=sflag, size = 0x4, scoped, tag = 'scoped memory for tpu_custom_call.1']
    #allocation5 [shape = 'u8[32768]{0}', space=vmem, size = 0x8000, scoped, tag = 'input window, operand 1, single buffered']
    #allocation6 [shape = 's32[1]{0}', space=sflag, size = 0x4, scoped, tag = 'scoped memory for tpu_custom_call.1']
    #allocation7 [shape = 'u8[16384]{0}', space=vmem, size = 0x4000, scoped, tag = 'output window, operand 0, single buffered']
    %10 = vsyncpa [#allocation3], 0
    %11 = vsyncpa [#allocation6], 0
    %12 = vsyncpa [#allocation4], 0
    // Predicated region
    $region2: #{tpu_custom_call.1} parent=1 // pred_check
      _
    $region3: #{tpu_custom_call.1} parent=1 // pred_check_branch
      %14 = sbr.rel (0) target = $region5
    $region4: #{tpu_custom_call.1} parent=1 // pred_region
      %s16 = ssub.s32 512, 512
      %17 = vsyncadd [#allocation3], %s16
      %s19 = sshll.u32 [#allocation2], 4
      %s20 = int_to_ptr.vmem [resolvable:$true] %s19
      %22 = dma.hbm_to_vmem [thread:$0]  %s0, 512, %s20, [#allocation3]
    $region5: #{tpu_custom_call.1} parent=1 // pred_fallthru
      _
    // Predicated region
    $region6: #{tpu_custom_call.1} parent=1 // pred_check
      _
    $region7: #{tpu_custom_call.1} parent=1 // pred_check_branch
      %24 = sbr.rel (0) target = $region9
    $region8: #{tpu_custom_call.1} parent=1 // pred_region
      %s26 = ssub.s32 1024, 1024
      %27 = vsyncadd [#allocation6], %s26
      %s28 = sshll.u32 [#allocation5], 4
      %s29 = int_to_ptr.vmem [resolvable:$true] %s28
      %34 = dma.hbm_to_vmem [thread:$0]  %s1, 1024, %s29, [#allocation6], 512, 512, 32
    $region9: #{tpu_custom_call.1} parent=1 // pred_fallthru
      _
    // Predicated region
    $region10: #{tpu_custom_call.1} parent=1 // pred_check
      _
    $region11: #{tpu_custom_call.1} parent=1 // pred_check_branch
      %36 = sbr.rel (0) target = $region13
    $region12: #{tpu_custom_call.1} parent=1 // pred_region
      _
    $region13: #{tpu_custom_call.1} parent=1 // pred_fallthru
      _
    // Predicated region
    $region14: #{tpu_custom_call.1} parent=1 // pred_check
      _
    $region15: #{tpu_custom_call.1} parent=1 // pred_check_branch
      %38 = sbr.rel (0) target = $region17
    $region16: #{tpu_custom_call.1} parent=1 // pred_region
      _
    $region17: #{tpu_custom_call.1} parent=1 // pred_fallthru
      _
    // Predicated region
    $region18: #{tpu_custom_call.1} parent=1 // pred_check
      _
    $region19: #{tpu_custom_call.1} parent=1 // pred_check_branch
      %40 = sbr.rel (0) target = $region21
    $region20: #{tpu_custom_call.1} parent=1 // pred_region
      _
    $region21: #{tpu_custom_call.1} parent=1 // pred_fallthru
      _
    // Predicated region
    $region22: #{tpu_custom_call.1} parent=1 // pred_check
      _
    $region23: #{tpu_custom_call.1} parent=1 // pred_check_branch
      %42 = sbr.rel (0) target = $region25
    $region24: #{tpu_custom_call.1} parent=1 // pred_region
      %43 = dma.done [#allocation3], 512
    $region25: #{tpu_custom_call.1} parent=1 // pred_fallthru
      _
    // Predicated region
    $region26: #{tpu_custom_call.1} parent=1 // pred_check
      _
    $region27: #{tpu_custom_call.1} parent=1 // pred_check_branch
      %45 = sbr.rel (0) target = $region29
    $region28: #{tpu_custom_call.1} parent=1 // pred_region
      %46 = dma.done [#allocation6], 1024
    $region29: #{tpu_custom_call.1} parent=1 // pred_fallthru
      _
    %v48 = vld [vmem:[#allocation2] sm:$0xff]
    %v49 = vld [vmem:[#allocation2 + $0x8] sm:$0xff]
    %v50 = vld [vmem:[#allocation2 + $0x10] sm:$0xff]
    %v51 = vld [vmem:[#allocation2 + $0x18] sm:$0xff]
    %v52 = vld [vmem:[#allocation5] sm:$0xff]
    %v53 = vld [vmem:[#allocation5 + $0x8] sm:$0xff]
    %v54 = vld [vmem:[#allocation5 + $0x10] sm:$0xff]
    %v55 = vld [vmem:[#allocation5 + $0x18] sm:$0xff]
    %v56 = vld [vmem:[#allocation5 + $0x20] sm:$0x1]
    %v57 = vld [vmem:[#allocation5 + $0x28] sm:$0x1]
    %v58 = vld [vmem:[#allocation5 + $0x30] sm:$0x1]
    %v59 = vld [vmem:[#allocation5 + $0x38] sm:$0x1]
    %v60 = vld [vmem:[%s2] sm:$0xff]
    %v61 = vld [vmem:[%s3] sm:$0xf]
    %63 = vset.pattern.permute.xlu0 0
    %64 = vperm.xlu0 %63, %v60
    %v65 = vpop.permute.xlu0 %64
    %v67 = vmul.f32 %v48, %v65
    %v68 = vmul.f32 %v49, %v65
    %v69 = vmul.f32 %v50, %v65
    %v70 = vmul.f32 %v51, %v65
    %71 = vset.pattern.permute.xlu0 1
    %72 = vperm.xlu0 %71, %v60
    %v73 = vpop.permute.xlu0 %72
    %v75 = vadd.f32 %v67, %v73
    %v76 = vadd.f32 %v68, %v73
    %v77 = vadd.f32 %v69, %v73
    %v78 = vadd.f32 %v70, %v73
    %v79 = vmax.f32 %v75, 0.0
    %v80 = vmax.f32 %v76, 0.0
    %v81 = vmax.f32 %v77, 0.0
    %v82 = vmax.f32 %v78, 0.0
    %84 = vrot.lane.b32.xlu0 %v82, 17
    %v85 = vpop.permute.xlu0 %84
    %90 = vrot.lane.b32.xlu0 %v79, 17
    %v91 = vpop.permute.xlu0 %90
    %92 = vrot.lane.b32.xlu0 %v80, 17
    %v93 = vpop.permute.xlu0 %92
    %94 = vrot.lane.b32.xlu0 %v81, 17
    %v95 = vpop.permute.xlu0 %94
    %vm96 = vcmask 138240
    %v97 = vsel %vm96, %v91, %v93
    %v98 = vsel %vm96, %v93, %v95
    %v99 = vsel %vm96, %v95, %v85
    %v104 = vsel %vm96, %v85, %v91
    %v105 = vlaneseq
    %v106 = vshrl.u32 %v105, 7
    %v107 = vsub.s32 0, %v106
    %v108 = vrot.slane %v52, %v107
    %v109 = vlaneseq
    %v110 = vshrl.u32 %v109, 7
    %v111 = vsub.s32 0, %v110
    %v112 = vrot.slane %v53, %v111
    %v113 = vlaneseq
    %v114 = vshrl.u32 %v113, 7
    %v115 = vsub.s32 0, %v114
    %v116 = vrot.slane %v54, %v115
    %v117 = vlaneseq
    %v118 = vshrl.u32 %v117, 7
    %v119 = vsub.s32 0, %v118
    %v120 = vrot.slane %v55, %v119
    %v121 = vmul.f32 %v104, %v108
    %v122 = vmul.f32 %v97, %v112
    %v123 = vmul.f32 %v98, %v116
    %v124 = vmul.f32 %v99, %v120
    %125 = vrot.lane.b32.xlu0 %v82, 16
    %v126 = vpop.permute.xlu0 %125
    %128 = vrot.lane.b32.xlu0 %v79, 16
    %v129 = vpop.permute.xlu0 %128
    %130 = vrot.lane.b32.xlu0 %v80, 16
    %v131 = vpop.permute.xlu0 %130
    %132 = vrot.lane.b32.xlu0 %v81, 16
    %v133 = vpop.permute.xlu0 %132
    %vm134 = vcmask 130048
    %v135 = vsel %vm134, %v129, %v131
    %v136 = vsel %vm134, %v131, %v133
    %v137 = vsel %vm134, %v133, %v126
    %v142 = vsel %vm134, %v126, %v129
    %v143 = vlaneseq
    %v144 = vshrl.u32 %v143, 7
    %v145 = vsub.s32 1, %v144
    %v146 = vrot.slane %v52, %v145
    %v147 = vlaneseq
    %v148 = vshrl.u32 %v147, 7
    %v149 = vsub.s32 1, %v148
    %v150 = vrot.slane %v53, %v149
    %v151 = vlaneseq
    %v152 = vshrl.u32 %v151, 7
    %v153 = vsub.s32 1, %v152
    %v154 = vrot.slane %v54, %v153
    %v155 = vlaneseq
    %v156 = vshrl.u32 %v155, 7
    %v157 = vsub.s32 1, %v156
    %v158 = vrot.slane %v55, %v157
    %v159 = vmul.f32 %v142, %v146
    %v160 = vmul.f32 %v135, %v150
    %v161 = vmul.f32 %v136, %v154
    %v162 = vmul.f32 %v137, %v158
    %163 = vrot.lane.b32.xlu0 %v82, 15
    %v164 = vpop.permute.xlu0 %163
    %166 = vrot.lane.b32.xlu0 %v79, 15
    %v167 = vpop.permute.xlu0 %166
    %168 = vrot.lane.b32.xlu0 %v80, 15
    %v169 = vpop.permute.xlu0 %168
    %170 = vrot.lane.b32.xlu0 %v81, 15
    %v171 = vpop.permute.xlu0 %170
    %vm172 = vcmask 121856
    %v173 = vsel %vm172, %v167, %v169
    %v174 = vsel %vm172, %v169, %v171
    %v175 = vsel %vm172, %v171, %v164
    %v180 = vsel %vm172, %v164, %v167
    %v181 = vlaneseq
    %v182 = vshrl.u32 %v181, 7
    %v183 = vsub.s32 2, %v182
    %v184 = vrot.slane %v52, %v183
    %v185 = vlaneseq
    %v186 = vshrl.u32 %v185, 7
    %v187 = vsub.s32 2, %v186
    %v188 = vrot.slane %v53, %v187
    %v189 = vlaneseq
    %v190 = vshrl.u32 %v189, 7
    %v191 = vsub.s32 2, %v190
    %v192 = vrot.slane %v54, %v191
    %v193 = vlaneseq
    %v194 = vshrl.u32 %v193, 7
    %v195 = vsub.s32 2, %v194
    %v196 = vrot.slane %v55, %v195
    %v197 = vmul.f32 %v180, %v184
    %v198 = vmul.f32 %v173, %v188
    %v199 = vmul.f32 %v174, %v192
    %v200 = vmul.f32 %v175, %v196
    %201 = vrot.lane.b32.xlu0 %v82, 1
    %v202 = vpop.permute.xlu0 %201
    %204 = vrot.lane.b32.xlu0 %v79, 1
    %v205 = vpop.permute.xlu0 %204
    %206 = vrot.lane.b32.xlu0 %v80, 1
    %v207 = vpop.permute.xlu0 %206
    %208 = vrot.lane.b32.xlu0 %v81, 1
    %v209 = vpop.permute.xlu0 %208
    %vm210 = vcmask 7168
    %v211 = vsel %vm210, %v205, %v207
    %v212 = vsel %vm210, %v207, %v209
    %v213 = vsel %vm210, %v209, %v202
    %v218 = vsel %vm210, %v202, %v205
    %v219 = vlaneseq
    %v220 = vshrl.u32 %v219, 7
    %v221 = vsub.s32 3, %v220
    %v222 = vrot.slane %v52, %v221
    %v223 = vlaneseq
    %v224 = vshrl.u32 %v223, 7
    %v225 = vsub.s32 3, %v224
    %v226 = vrot.slane %v53, %v225
    %v227 = vlaneseq
    %v228 = vshrl.u32 %v227, 7
    %v229 = vsub.s32 3, %v228
    %v230 = vrot.slane %v54, %v229
    %v231 = vlaneseq
    %v232 = vshrl.u32 %v231, 7
    %v233 = vsub.s32 3, %v232
    %v234 = vrot.slane %v55, %v233
    %v235 = vmul.f32 %v218, %v222
    %v236 = vmul.f32 %v211, %v226
    %v237 = vmul.f32 %v212, %v230
    %v238 = vmul.f32 %v213, %v234
    %239 = vrot.lane.b32.xlu0 %v79, 127
    %v240 = vpop.permute.xlu0 %239
    %241 = vrot.lane.b32.xlu0 %v80, 127
    %v242 = vpop.permute.xlu0 %241
    %243 = vrot.lane.b32.xlu0 %v81, 127
    %v244 = vpop.permute.xlu0 %243
    %245 = vrot.lane.b32.xlu0 %v82, 127
    %v246 = vpop.permute.xlu0 %245
    %vm247 = vcmask 1039360
    %v248 = vsel %vm247, %v240, %v242
    %v249 = vsel %vm247, %v242, %v244
    %v250 = vsel %vm247, %v244, %v246
    %v256 = vsel %vm247, %v246, %v240
    %v257 = vlaneseq
    %v258 = vshrl.u32 %v257, 7
    %v259 = vsub.s32 5, %v258
    %v260 = vrot.slane %v52, %v259
    %v261 = vlaneseq
    %v262 = vshrl.u32 %v261, 7
    %v263 = vsub.s32 5, %v262
    %v264 = vrot.slane %v53, %v263
    %v265 = vlaneseq
    %v266 = vshrl.u32 %v265, 7
    %v267 = vsub.s32 5, %v266
    %v268 = vrot.slane %v54, %v267
    %v269 = vlaneseq
    %v270 = vshrl.u32 %v269, 7
    %v271 = vsub.s32 5, %v270
    %v272 = vrot.slane %v55, %v271
    %v273 = vmul.f32 %v248, %v260
    %v274 = vmul.f32 %v249, %v264
    %v275 = vmul.f32 %v250, %v268
    %v276 = vmul.f32 %v256, %v272
    %277 = vrot.lane.b32.xlu0 %v79, 113
    %v278 = vpop.permute.xlu0 %277
    %279 = vrot.lane.b32.xlu0 %v80, 113
    %v280 = vpop.permute.xlu0 %279
    %281 = vrot.lane.b32.xlu0 %v81, 113
    %v282 = vpop.permute.xlu0 %281
    %283 = vrot.lane.b32.xlu0 %v82, 113
    %v284 = vpop.permute.xlu0 %283
    %vm285 = vcmask 924672
    %v286 = vsel %vm285, %v278, %v280
    %v287 = vsel %vm285, %v280, %v282
    %v288 = vsel %vm285, %v282, %v284
    %v294 = vsel %vm285, %v284, %v278
    %v295 = vlaneseq
    %v296 = vshrl.u32 %v295, 7
    %v297 = vsub.s32 6, %v296
    %v298 = vrot.slane %v52, %v297
    %v299 = vlaneseq
    %v300 = vshrl.u32 %v299, 7
    %v301 = vsub.s32 6, %v300
    %v302 = vrot.slane %v53, %v301
    %v303 = vlaneseq
    %v304 = vshrl.u32 %v303, 7
    %v305 = vsub.s32 6, %v304
    %v306 = vrot.slane %v54, %v305
    %v307 = vlaneseq
    %v308 = vshrl.u32 %v307, 7
    %v309 = vsub.s32 6, %v308
    %v310 = vrot.slane %v55, %v309
    %v311 = vmul.f32 %v286, %v298
    %v312 = vmul.f32 %v287, %v302
    %v313 = vmul.f32 %v288, %v306
    %v314 = vmul.f32 %v294, %v310
    %315 = vrot.lane.b32.xlu0 %v79, 112
    %v316 = vpop.permute.xlu0 %315
    %317 = vrot.lane.b32.xlu0 %v80, 112
    %v318 = vpop.permute.xlu0 %317
    %319 = vrot.lane.b32.xlu0 %v81, 112
    %v320 = vpop.permute.xlu0 %319
    %321 = vrot.lane.b32.xlu0 %v82, 112
    %v322 = vpop.permute.xlu0 %321
    %vm323 = vcmask 916480
    %v324 = vsel %vm323, %v316, %v318
    %v325 = vsel %vm323, %v318, %v320
    %v326 = vsel %vm323, %v320, %v322
    %v332 = vsel %vm323, %v322, %v316
    %v333 = vlaneseq
    %v334 = vshrl.u32 %v333, 7
    %v335 = vsub.s32 7, %v334
    %v336 = vrot.slane %v52, %v335
    %v337 = vlaneseq
    %v338 = vshrl.u32 %v337, 7
    %v339 = vsub.s32 7, %v338
    %v340 = vrot.slane %v53, %v339
    %v341 = vlaneseq
    %v342 = vshrl.u32 %v341, 7
    %v343 = vsub.s32 7, %v342
    %v344 = vrot.slane %v54, %v343
    %v345 = vlaneseq
    %v346 = vshrl.u32 %v345, 7
    %v347 = vsub.s32 7, %v346
    %v348 = vrot.slane %v55, %v347
    %v349 = vmul.f32 %v324, %v336
    %v350 = vmul.f32 %v325, %v340
    %v351 = vmul.f32 %v326, %v344
    %v352 = vmul.f32 %v332, %v348
    %353 = vrot.lane.b32.xlu0 %v79, 111
    %v354 = vpop.permute.xlu0 %353
    %355 = vrot.lane.b32.xlu0 %v80, 111
    %v356 = vpop.permute.xlu0 %355
    %357 = vrot.lane.b32.xlu0 %v81, 111
    %v358 = vpop.permute.xlu0 %357
    %359 = vrot.lane.b32.xlu0 %v82, 111
    %v360 = vpop.permute.xlu0 %359
    %vm361 = vcmask 908288
    %v362 = vsel %vm361, %v354, %v356
    %v363 = vsel %vm361, %v356, %v358
    %v364 = vsel %vm361, %v358, %v360
    %v370 = vsel %vm361, %v360, %v354
    %v371 = vlaneseq
    %v372 = vshrl.u32 %v371, 7
    %v373 = vsub.s32 0, %v372
    %v374 = vrot.slane %v56, %v373
    %v375 = vlaneseq
    %v376 = vshrl.u32 %v375, 7
    %v377 = vsub.s32 0, %v376
    %v378 = vrot.slane %v57, %v377
    %v379 = vlaneseq
    %v380 = vshrl.u32 %v379, 7
    %v381 = vsub.s32 0, %v380
    %v382 = vrot.slane %v58, %v381
    %v383 = vlaneseq
    %v384 = vshrl.u32 %v383, 7
    %v385 = vsub.s32 0, %v384
    %v386 = vrot.slane %v59, %v385
    %v387 = vmul.f32 %v362, %v374
    %v388 = vmul.f32 %v363, %v378
    %v389 = vmul.f32 %v364, %v382
    %v390 = vmul.f32 %v370, %v386
    %v391 = vpack.c.bf16 %v159, %v121
    %v392 = vpack.c.bf16 %v160, %v122
    %v393 = vpack.c.bf16 %v161, %v123
    %v394 = vpack.c.bf16 %v162, %v124
    %v395 = vpack.c.bf16 %v235, %v197
    %v396 = vpack.c.bf16 %v236, %v198
    %v397 = vpack.c.bf16 %v237, %v199
    %v398 = vpack.c.bf16 %v238, %v200
    %v399 = vpack.c.bf16 %v273, %v79
    %v400 = vpack.c.bf16 %v274, %v80
    %v401 = vpack.c.bf16 %v275, %v81
    %v402 = vpack.c.bf16 %v276, %v82
    %v403 = vpack.c.bf16 %v349, %v311
    %v404 = vpack.c.bf16 %v350, %v312
    %v405 = vpack.c.bf16 %v351, %v313
    %v406 = vpack.c.bf16 %v352, %v314
    %v407 = vpack.c.bf16 %v387, %v387
    %v408 = vpack.c.bf16 %v388, %v388
    %v409 = vpack.c.bf16 %v389, %v389
    %v410 = vpack.c.bf16 %v390, %v390
    %vm411 = vcmask 588800
    %v413 = vsel %vm411, %v61, 0
    %vm415 = vcmask 1043456
    %v417 = vsel %vm415, %v407, 0
    %v420 = vsel %vm415, %v408, 0
    %v423 = vsel %vm415, %v409, 0
    %v426 = vsel %vm415, %v410, 0
    %428 = vmatprep.subr.bf16.mxu0 %v392
    %429 = vmatpush1.bf16.msra.mxu0 %v391
    %430 = vmatprep.subr.bf16.mxu0 %v396
    %431 = vmatpush1.bf16.msra.mxu0 %v395
    %432 = vmatprep.subr.bf16.mxu0 %v400
    %433 = vmatpush1.bf16.msra.mxu0 %v399
    %434 = vmatprep.subr.bf16.mxu0 %v404
    %435 = vmatpush1.bf16.msra.mxu0 %v403
    %436 = vmatprep.subr.bf16.mxu0 %v420
    %437 = vmatpush1.bf16.msra.mxu0 %v417
    %438 = vmatprep.subr.bf16.mxu0 0
    %439 = vmatpush1.bf16.msra.mxu0 0
    %440 = vmatprep.subr.bf16.mxu0 0
    %441 = vmatpush1.bf16.msra.mxu0 0
    %442 = vmatprep.subr.bf16.mxu0 0
    %443 = vmatpush1.bf16.msra.mxu0 0
    %444 = vmatprep.subr.bf16.mxu0 0
    %445 = vmatpush1.bf16.msra.mxu0 0
    %446 = vmatprep.subr.bf16.mxu0 0
    %447 = vmatpush1.bf16.msra.mxu0 0
    %448 = vmatprep.subr.bf16.mxu0 0
    %449 = vmatpush1.bf16.msra.mxu0 0
    %450 = vmatprep.subr.bf16.mxu0 0
    %451 = vmatpush1.bf16.msra.mxu0 0
    %452 = vmatprep.subr.bf16.mxu0 0
    %453 = vmatpush1.bf16.msra.mxu0 0
    %454 = vmatprep.subr.bf16.mxu0 0
    %455 = vmatpush1.bf16.msra.mxu0 0
    %456 = vmatprep.subr.bf16.mxu0 0
    %457 = vmatpush1.bf16.msra.mxu0 0
    %458 = vmatprep.subr.bf16.mxu0 0
    %459 = vmatpush1.bf16.msra.mxu0 0
    %460 = vmatprep.mubr.bf16.mxu0 0
    %461 = vmatmul.mubr.bf16.gmra.mrb[0].mxu0 %v413
    %v462 = vpop.f32.mrb[0].mxu0
    %v463 = vadd.f32 0.0, %v462
    %v464 = vpop.f32.mrb[0].mxu0
    %v465 = vadd.f32 0.0, %v464
    %v466 = vpop.f32.mrb[0].mxu0
    %v467 = vpop.f32.mrb[0].mxu0
    %468 = vdwg.mxu0
    %469 = vmatprep.subr.bf16.mxu0 %v394
    %470 = vmatpush1.bf16.msra.mxu0 %v393
    %471 = vmatprep.subr.bf16.mxu0 %v398
    %472 = vmatpush1.bf16.msra.mxu0 %v397
    %473 = vmatprep.subr.bf16.mxu0 %v402
    %474 = vmatpush1.bf16.msra.mxu0 %v401
    %475 = vmatprep.subr.bf16.mxu0 %v406
    %476 = vmatpush1.bf16.msra.mxu0 %v405
    %477 = vmatprep.subr.bf16.mxu0 %v426
    %478 = vmatpush1.bf16.msra.mxu0 %v423
    %479 = vmatprep.subr.bf16.mxu0 0
    %480 = vmatpush1.bf16.msra.mxu0 0
    %481 = vmatprep.subr.bf16.mxu0 0
    %482 = vmatpush1.bf16.msra.mxu0 0
    %483 = vmatprep.subr.bf16.mxu0 0
    %484 = vmatpush1.bf16.msra.mxu0 0
    %485 = vmatprep.subr.bf16.mxu0 0
    %486 = vmatpush1.bf16.msra.mxu0 0
    %487 = vmatprep.subr.bf16.mxu0 0
    %488 = vmatpush1.bf16.msra.mxu0 0
    %489 = vmatprep.subr.bf16.mxu0 0
    %490 = vmatpush1.bf16.msra.mxu0 0
    %491 = vmatprep.subr.bf16.mxu0 0
    %492 = vmatpush1.bf16.msra.mxu0 0
    %493 = vmatprep.subr.bf16.mxu0 0
    %494 = vmatpush1.bf16.msra.mxu0 0
    %495 = vmatprep.subr.bf16.mxu0 0
    %496 = vmatpush1.bf16.msra.mxu0 0
    %497 = vmatprep.subr.bf16.mxu0 0
    %498 = vmatpush1.bf16.msra.mxu0 0
    %499 = vmatprep.subr.bf16.mxu0 0
    %500 = vmatpush1.bf16.msra.mxu0 0
    %501 = vmatprep.mubr.bf16.mxu0 0
    %502 = vmatmul.mubr.bf16.gmra.mrb[0].mxu0 %v413
    %v503 = vpop.f32.mrb[0].mxu0
    %v504 = vadd.f32 0.0, %v503
    %v505 = vpop.f32.mrb[0].mxu0
    %v506 = vadd.f32 0.0, %v505
    %v507 = vpop.f32.mrb[0].mxu0
    %v508 = vpop.f32.mrb[0].mxu0
    %509 = vdwg.mxu0
    %v510 = vld [vmem:[%s4] sm:$0xf]
    %511 = vset.pattern.permute.xlu0 2
    %512 = vperm.xlu0 %511, %v60
    %v513 = vpop.permute.xlu0 %512
    %v515 = vmul.f32 %v463, %v513
    %v516 = vmul.f32 %v465, %v513
    %v517 = vmul.f32 %v504, %v513
    %v518 = vmul.f32 %v506, %v513
    %519 = vset.pattern.permute.xlu0 3
    %520 = vperm.xlu0 %519, %v60
    %v521 = vpop.permute.xlu0 %520
    %v523 = vadd.f32 %v515, %v521
    %v524 = vadd.f32 %v516, %v521
    %v525 = vadd.f32 %v517, %v521
    %v526 = vadd.f32 %v518, %v521
    %v527 = vmax.f32 %v523, 0.0
    %v528 = vmax.f32 %v524, 0.0
    %v529 = vmax.f32 %v525, 0.0
    %v530 = vmax.f32 %v526, 0.0
    %532 = vrot.lane.b32.xlu0 %v530, 17
    %v533 = vpop.permute.xlu0 %532
    %538 = vrot.lane.b32.xlu0 %v527, 17
    %v539 = vpop.permute.xlu0 %538
    %540 = vrot.lane.b32.xlu0 %v528, 17
    %v541 = vpop.permute.xlu0 %540
    %542 = vrot.lane.b32.xlu0 %v529, 17
    %v543 = vpop.permute.xlu0 %542
    %v544 = vsel %vm96, %v539, %v541
    %v545 = vsel %vm96, %v541, %v543
    %v546 = vsel %vm96, %v543, %v533
    %v551 = vsel %vm96, %v533, %v539
    %v552 = vmul.f32 %v551, %v108
    %v553 = vmul.f32 %v544, %v112
    %v554 = vmul.f32 %v545, %v116
    %v555 = vmul.f32 %v546, %v120
    %556 = vrot.lane.b32.xlu0 %v530, 16
    %v557 = vpop.permute.xlu0 %556
    %559 = vrot.lane.b32.xlu0 %v527, 16
    %v560 = vpop.permute.xlu0 %559
    %561 = vrot.lane.b32.xlu0 %v528, 16
    %v562 = vpop.permute.xlu0 %561
    %563 = vrot.lane.b32.xlu0 %v529, 16
    %v564 = vpop.permute.xlu0 %563
    %v565 = vsel %vm134, %v560, %v562
    %v566 = vsel %vm134, %v562, %v564
    %v567 = vsel %vm134, %v564, %v557
    %v572 = vsel %vm134, %v557, %v560
    %v573 = vmul.f32 %v572, %v146
    %v574 = vmul.f32 %v565, %v150
    %v575 = vmul.f32 %v566, %v154
    %v576 = vmul.f32 %v567, %v158
    %577 = vrot.lane.b32.xlu0 %v530, 15
    %v578 = vpop.permute.xlu0 %577
    %580 = vrot.lane.b32.xlu0 %v527, 15
    %v581 = vpop.permute.xlu0 %580
    %582 = vrot.lane.b32.xlu0 %v528, 15
    %v583 = vpop.permute.xlu0 %582
    %584 = vrot.lane.b32.xlu0 %v529, 15
    %v585 = vpop.permute.xlu0 %584
    %v586 = vsel %vm172, %v581, %v583
    %v587 = vsel %vm172, %v583, %v585
    %v588 = vsel %vm172, %v585, %v578
    %v593 = vsel %vm172, %v578, %v581
    %v594 = vmul.f32 %v593, %v184
    %v595 = vmul.f32 %v586, %v188
    %v596 = vmul.f32 %v587, %v192
    %v597 = vmul.f32 %v588, %v196
    %598 = vrot.lane.b32.xlu0 %v530, 1
    %v599 = vpop.permute.xlu0 %598
    %601 = vrot.lane.b32.xlu0 %v527, 1
    %v602 = vpop.permute.xlu0 %601
    %603 = vrot.lane.b32.xlu0 %v528, 1
    %v604 = vpop.permute.xlu0 %603
    %605 = vrot.lane.b32.xlu0 %v529, 1
    %v606 = vpop.permute.xlu0 %605
    %v607 = vsel %vm210, %v602, %v604
    %v608 = vsel %vm210, %v604, %v606
    %v609 = vsel %vm210, %v606, %v599
    %v614 = vsel %vm210, %v599, %v602
    %v615 = vmul.f32 %v614, %v222
    %v616 = vmul.f32 %v607, %v226
    %v617 = vmul.f32 %v608, %v230
    %v618 = vmul.f32 %v609, %v234
    %619 = vrot.lane.b32.xlu0 %v527, 127
    %v620 = vpop.permute.xlu0 %619
    %621 = vrot.lane.b32.xlu0 %v528, 127
    %v622 = vpop.permute.xlu0 %621
    %623 = vrot.lane.b32.xlu0 %v529, 127
    %v624 = vpop.permute.xlu0 %623
    %625 = vrot.lane.b32.xlu0 %v530, 127
    %v626 = vpop.permute.xlu0 %625
    %v627 = vsel %vm247, %v620, %v622
    %v628 = vsel %vm247, %v622, %v624
    %v629 = vsel %vm247, %v624, %v626
    %v635 = vsel %vm247, %v626, %v620
    %v636 = vmul.f32 %v627, %v260
    %v637 = vmul.f32 %v628, %v264
    %v638 = vmul.f32 %v629, %v268
    %v639 = vmul.f32 %v635, %v272
    %640 = vrot.lane.b32.xlu0 %v527, 113
    %v641 = vpop.permute.xlu0 %640
    %642 = vrot.lane.b32.xlu0 %v528, 113
    %v643 = vpop.permute.xlu0 %642
    %644 = vrot.lane.b32.xlu0 %v529, 113
    %v645 = vpop.permute.xlu0 %644
    %646 = vrot.lane.b32.xlu0 %v530, 113
    %v647 = vpop.permute.xlu0 %646
    %v648 = vsel %vm285, %v641, %v643
    %v649 = vsel %vm285, %v643, %v645
    %v650 = vsel %vm285, %v645, %v647
    %v656 = vsel %vm285, %v647, %v641
    %v657 = vmul.f32 %v648, %v298
    %v658 = vmul.f32 %v649, %v302
    %v659 = vmul.f32 %v650, %v306
    %v660 = vmul.f32 %v656, %v310
    %661 = vrot.lane.b32.xlu0 %v527, 112
    %v662 = vpop.permute.xlu0 %661
    %663 = vrot.lane.b32.xlu0 %v528, 112
    %v664 = vpop.permute.xlu0 %663
    %665 = vrot.lane.b32.xlu0 %v529, 112
    %v666 = vpop.permute.xlu0 %665
    %667 = vrot.lane.b32.xlu0 %v530, 112
    %v668 = vpop.permute.xlu0 %667
    %v669 = vsel %vm323, %v662, %v664
    %v670 = vsel %vm323, %v664, %v666
    %v671 = vsel %vm323, %v666, %v668
    %v677 = vsel %vm323, %v668, %v662
    %v678 = vmul.f32 %v669, %v336
    %v679 = vmul.f32 %v670, %v340
    %v680 = vmul.f32 %v671, %v344
    %v681 = vmul.f32 %v677, %v348
    %682 = vrot.lane.b32.xlu0 %v527, 111
    %v683 = vpop.permute.xlu0 %682
    %684 = vrot.lane.b32.xlu0 %v528, 111
    %v685 = vpop.permute.xlu0 %684
    %686 = vrot.lane.b32.xlu0 %v529, 111
    %v687 = vpop.permute.xlu0 %686
    %688 = vrot.lane.b32.xlu0 %v530, 111
    %v689 = vpop.permute.xlu0 %688
    %v690 = vsel %vm361, %v683, %v685
    %v691 = vsel %vm361, %v685, %v687
    %v692 = vsel %vm361, %v687, %v689
    %v698 = vsel %vm361, %v689, %v683
    %v699 = vmul.f32 %v690, %v374
    %v700 = vmul.f32 %v691, %v378
    %v701 = vmul.f32 %v692, %v382
    %v702 = vmul.f32 %v698, %v386
    %v703 = vpack.c.bf16 %v573, %v552
    %v704 = vpack.c.bf16 %v574, %v553
    %v705 = vpack.c.bf16 %v575, %v554
    %v706 = vpack.c.bf16 %v576, %v555
    %v707 = vpack.c.bf16 %v615, %v594
    %v708 = vpack.c.bf16 %v616, %v595
    %v709 = vpack.c.bf16 %v617, %v596
    %v710 = vpack.c.bf16 %v618, %v597
    %v711 = vpack.c.bf16 %v636, %v527
    %v712 = vpack.c.bf16 %v637, %v528
    %v713 = vpack.c.bf16 %v638, %v529
    %v714 = vpack.c.bf16 %v639, %v530
    %v715 = vpack.c.bf16 %v678, %v657
    %v716 = vpack.c.bf16 %v679, %v658
    %v717 = vpack.c.bf16 %v680, %v659
    %v718 = vpack.c.bf16 %v681, %v660
    %v719 = vpack.c.bf16 %v699, %v699
    %v720 = vpack.c.bf16 %v700, %v700
    %v721 = vpack.c.bf16 %v701, %v701
    %v722 = vpack.c.bf16 %v702, %v702
    %v724 = vsel %vm411, %v510, 0
    %v727 = vsel %vm415, %v719, 0
    %v730 = vsel %vm415, %v720, 0
    %v733 = vsel %vm415, %v721, 0
    %v736 = vsel %vm415, %v722, 0
    %738 = vmatprep.subr.bf16.mxu0 %v704
    %739 = vmatpush1.bf16.msra.mxu0 %v703
    %740 = vmatprep.subr.bf16.mxu0 %v708
    %741 = vmatpush1.bf16.msra.mxu0 %v707
    %742 = vmatprep.subr.bf16.mxu0 %v712
    %743 = vmatpush1.bf16.msra.mxu0 %v711
    %744 = vmatprep.subr.bf16.mxu0 %v716
    %745 = vmatpush1.bf16.msra.mxu0 %v715
    %746 = vmatprep.subr.bf16.mxu0 %v730
    %747 = vmatpush1.bf16.msra.mxu0 %v727
    %748 = vmatprep.subr.bf16.mxu0 0
    %749 = vmatpush1.bf16.msra.mxu0 0
    %750 = vmatprep.subr.bf16.mxu0 0
    %751 = vmatpush1.bf16.msra.mxu0 0
    %752 = vmatprep.subr.bf16.mxu0 0
    %753 = vmatpush1.bf16.msra.mxu0 0
    %754 = vmatprep.subr.bf16.mxu0 0
    %755 = vmatpush1.bf16.msra.mxu0 0
    %756 = vmatprep.subr.bf16.mxu0 0
    %757 = vmatpush1.bf16.msra.mxu0 0
    %758 = vmatprep.subr.bf16.mxu0 0
    %759 = vmatpush1.bf16.msra.mxu0 0
    %760 = vmatprep.subr.bf16.mxu0 0
    %761 = vmatpush1.bf16.msra.mxu0 0
    %762 = vmatprep.subr.bf16.mxu0 0
    %763 = vmatpush1.bf16.msra.mxu0 0
    %764 = vmatprep.subr.bf16.mxu0 0
    %765 = vmatpush1.bf16.msra.mxu0 0
    %766 = vmatprep.subr.bf16.mxu0 0
    %767 = vmatpush1.bf16.msra.mxu0 0
    %768 = vmatprep.subr.bf16.mxu0 0
    %769 = vmatpush1.bf16.msra.mxu0 0
    %770 = vmatprep.mubr.bf16.mxu0 0
    %771 = vmatmul.mubr.bf16.gmra.mrb[0].mxu0 %v724
    %v772 = vpop.f32.mrb[0].mxu0
    %v773 = vadd.f32 0.0, %v772
    %v774 = vpop.f32.mrb[0].mxu0
    %v775 = vadd.f32 0.0, %v774
    %v776 = vpop.f32.mrb[0].mxu0
    %v777 = vpop.f32.mrb[0].mxu0
    %778 = vdwg.mxu0
    %779 = vmatprep.subr.bf16.mxu0 %v706
    %780 = vmatpush1.bf16.msra.mxu0 %v705
    %781 = vmatprep.subr.bf16.mxu0 %v710
    %782 = vmatpush1.bf16.msra.mxu0 %v709
    %783 = vmatprep.subr.bf16.mxu0 %v714
    %784 = vmatpush1.bf16.msra.mxu0 %v713
    %785 = vmatprep.subr.bf16.mxu0 %v718
    %786 = vmatpush1.bf16.msra.mxu0 %v717
    %787 = vmatprep.subr.bf16.mxu0 %v736
    %788 = vmatpush1.bf16.msra.mxu0 %v733
    %789 = vmatprep.subr.bf16.mxu0 0
    %790 = vmatpush1.bf16.msra.mxu0 0
    %791 = vmatprep.subr.bf16.mxu0 0
    %792 = vmatpush1.bf16.msra.mxu0 0
    %793 = vmatprep.subr.bf16.mxu0 0
    %794 = vmatpush1.bf16.msra.mxu0 0
    %795 = vmatprep.subr.bf16.mxu0 0
    %796 = vmatpush1.bf16.msra.mxu0 0
    %797 = vmatprep.subr.bf16.mxu0 0
    %798 = vmatpush1.bf16.msra.mxu0 0
    %799 = vmatprep.subr.bf16.mxu0 0
    %800 = vmatpush1.bf16.msra.mxu0 0
    %801 = vmatprep.subr.bf16.mxu0 0
    %802 = vmatpush1.bf16.msra.mxu0 0
    %803 = vmatprep.subr.bf16.mxu0 0
    %804 = vmatpush1.bf16.msra.mxu0 0
    %805 = vmatprep.subr.bf16.mxu0 0
    %806 = vmatpush1.bf16.msra.mxu0 0
    %807 = vmatprep.subr.bf16.mxu0 0
    %808 = vmatpush1.bf16.msra.mxu0 0
    %809 = vmatprep.subr.bf16.mxu0 0
    %810 = vmatpush1.bf16.msra.mxu0 0
    %811 = vmatprep.mubr.bf16.mxu0 0
    %812 = vmatmul.mubr.bf16.gmra.mrb[0].mxu0 %v724
    %v813 = vpop.f32.mrb[0].mxu0
    %v814 = vadd.f32 0.0, %v813
    %v815 = vpop.f32.mrb[0].mxu0
    %v816 = vadd.f32 0.0, %v815
    %v817 = vpop.f32.mrb[0].mxu0
    %v818 = vpop.f32.mrb[0].mxu0
    %819 = vdwg.mxu0
    %820 = vst [vmem:[#allocation7] sm:$0xff] %v773
    %821 = vst [vmem:[#allocation7 + $0x8] sm:$0xff] %v775
    %822 = vst [vmem:[#allocation7 + $0x10] sm:$0xff] %v814
    %823 = vst [vmem:[#allocation7 + $0x18] sm:$0xff] %v816
    // Predicated region
    $region30: #{tpu_custom_call.1} parent=1 // pred_check
      _
    $region31: #{tpu_custom_call.1} parent=1 // pred_check_branch
      %825 = sbr.rel (0) target = $region33
    $region32: #{tpu_custom_call.1} parent=1 // pred_region
      %s827 = ssub.s32 512, 512
      %828 = vsyncadd [#allocation4], %s827
      %s830 = sshll.u32 [#allocation7], 4
      %s831 = int_to_ptr.vmem [resolvable:$true] %s830
      %833 = dma.vmem_to_hbm [thread:$0]  %s831, 512, %s5, [#allocation4]
    $region33: #{tpu_custom_call.1} parent=1 // pred_fallthru
      _
    // Predicated region
    $region34: #{tpu_custom_call.1} parent=1 // pred_check
      _
    $region35: #{tpu_custom_call.1} parent=1 // pred_check_branch
      %835 = sbr.rel (0) target = $region37
    $region36: #{tpu_custom_call.1} parent=1 // pred_region
      %836 = dma.done [#allocation4], 512
    $region37: #{tpu_custom_call.1} parent=1 // pred_fallthru
      _
    %837 = vsyncpa [#allocation3], 1
    %838 = vsyncpa [#allocation6], 1
    %839 = vsyncpa [#allocation4], 1

</llo_original>
